<compile_context>
chip_gen: v5e
topology: v5e:2x2
jax: 0.10.0
libtpu: 0.0.40
codegen_flags: <defaults>
</compile_context>

<pallas_src>
import functools

import jax
import jax.numpy as jnp
from jax.experimental import pallas as pl
from jax.experimental.pallas import tpu as pltpu

EPS = 1e-6


def _vmem_capacity_bytes():
    try:
        return int(pltpu.get_tpu_info().vmem_capacity_bytes)
    except Exception:
        return 64 * 1024 * 1024  # conservative fallback (v7x per-TC)


def _num_tensorcores():
    """Best-effort TensorCore count (v7x has 2 per chip); fall back to 1."""
    try:
        info = pltpu.get_tpu_info()
        for attr in ("num_cores", "core_count", "num_tensorcores", "tensorcore_count"):
            v = getattr(info, attr, None)
            if v:
                return int(v)
    except Exception:
        pass
    return 1


def _per_row_vmem_bytes(D, dbytes):
    # 3 HBM-facing tiles (x, y, out) x 2 pipeline buffers (io dtype)
    # + ~6 f32 full-width temporaries inside the kernel body.
    return 3 * 2 * D * dbytes + 6 * D * 4


def _choose_block_rows(rows, D, dtype):
    """Row-tile size: large (MiB-scale) tiles, VMEM-budget clamped, no padding needed."""
    dbytes = jnp.dtype(dtype).itemsize
    # sublane packing granularity: f32 -> 8 rows, bf16 -> 16, int8/fp8 -> 32
    sublane = max(8, 32 // max(dbytes, 1))

    vmem_cap = _vmem_capacity_bytes()

    # Byte-based tile target per input (bigger on high-BW / small-VMEM chips
    # like v7x so the ~0.35us per-step overhead stays negligible).
    target_bytes = (4 << 20) if vmem_cap <= (64 << 20) else (2 << 20)
    br = max(sublane, target_bytes // max(D * dbytes, 1))

    # Clamp by VMEM budget (double-buffered I/O + f32 temps), with headroom.
    budget = vmem_cap // 2
    br = min(br, max(sublane, budget // _per_row_vmem_bytes(D, dbytes)))

    # Megacore: only split when there is more than one TensorCore, and then
    # guarantee >= 2 grid steps per core so each core keeps its pipeline full.
    ncores = _num_tensorcores()
    if ncores >= 2:
        min_steps = 2 * ncores
        if rows >= min_steps * sublane:
            br_split = max(sublane, ((rows // min_steps) // sublane) * sublane)
            br = min(br, br_split)

    if rows <= br:
        # Single block covering the full row extent (always a legal block shape).
        return rows

    br = max(sublane, (br // sublane) * sublane)
    return br


def _sublayer_conn_kernel(x_ref, y_ref, a_ref, b_ref, o_ref, *, eps):
    # z = x + dropout(sublayer(x));  dropout == identity (eval mode)
    z = x_ref[...].astype(jnp.float32) + y_ref[...].astype(jnp.float32)
    d = z.shape[-1]

    mean = jnp.mean(z, axis=-1, keepdims=True)
    centered = z - mean
    # unbiased variance (PyTorch .std default: correction = 1)
    var = jnp.sum(centered * centered, axis=-1, keepdims=True) / (d - 1)
    std = jnp.sqrt(var)

    a = a_ref[...].astype(jnp.float32)  # (1, D) -> broadcasts over rows
    b = b_ref[...].astype(jnp.float32)  # (1, D)
    # Exact divide: HBM-bound kernel, VALU/EUP slack hides it completely.
    out = a * centered / (std + eps) + b
    o_ref[...] = out.astype(o_ref.dtype)


def sublayer_connection(x, sublayer_out, a_2, b_2, *, eps=EPS, block_rows=None):
    """x, sublayer_out: (B, S, D); a_2, b_2: (D,). Returns (B, S, D)."""
    B, S, D = x.shape
    rows = B * S
    dtype = x.dtype
    dbytes = jnp.dtype(dtype).itemsize

    if block_rows is None:
        block_rows = _choose_block_rows(rows, D, dtype)

    x2 = x.reshape(rows, D)
    y2 = sublayer_out.reshape(rows, D)
    a2 = a_2.reshape(1, D)
    b2 = b_2.reshape(1, D)

    # Scoped-VMEM limit: what the pipeline needs plus a fixed margin (not a
    # fraction of physical capacity), so Mosaic keeps headroom on 64-MiB chips.
    vmem_cap = _vmem_capacity_bytes()
    needed = block_rows * _per_row_vmem_bytes(D, dbytes) + (2 << 20)
    vmem_limit = int(min(int(0.75 * vmem_cap), max(32 << 20, needed + (8 << 20))))

    grid = (pl.cdiv(rows, block_rows),)
    out = pl.pallas_call(
        functools.partial(_sublayer_conn_kernel, eps=eps),
        out_shape=jax.ShapeDtypeStruct((rows, D), dtype),
        grid_spec=pltpu.PrefetchScalarGridSpec(
            num_scalar_prefetch=0,
            grid=grid,
            in_specs=[
                pl.BlockSpec((block_rows, D), lambda i: (i, 0)),
                pl.BlockSpec((block_rows, D), lambda i: (i, 0)),
                pl.BlockSpec((1, D), lambda i: (0, 0)),  # resident across steps
                pl.BlockSpec((1, D), lambda i: (0, 0)),  # resident across steps
            ],
            out_specs=pl.BlockSpec((block_rows, D), lambda i: (i, 0)),
        ),
        compiler_params=pltpu.CompilerParams(
            dimension_semantics=("parallel",),
            vmem_limit_bytes=vmem_limit,
        ),
    )(x2, y2, a2, b2)

    return out.reshape(B, S, D)


def _reference(x, y, a_2, b_2, eps=EPS):
    z = x + y
    mean = jnp.mean(z, axis=-1, keepdims=True)
    centered = z - mean
    var = jnp.sum(centered * centered, axis=-1, keepdims=True) / (z.shape[-1] - 1)
    std = jnp.sqrt(var)
    return a_2 * centered / (std + eps) + b_2


if __name__ == "__main__":
    key = jax.random.PRNGKey(0)
    # Small shapes consistent with the module; D a multiple of 128 so the
    # output stores are lane-dense.
    B, S, D = 2, 8, 128

    kx, kw, kb = jax.random.split(key, 3)
    x = jax.random.normal(kx, (B, S, D), dtype=jnp.float32)

    # Parameters exactly as in LayerNorm.__init__: ones / zeros (deterministic).
    a_2 = jnp.ones((D,), dtype=jnp.float32)
    b_2 = jnp.zeros((D,), dtype=jnp.float32)

    # A deterministic example "sublayer" (plain-JAX glue): a small linear map.
    # The SublayerConnection module itself only owns the residual + LayerNorm,
    # which is the Pallas hot path above.
    W = 0.05 * jax.random.normal(kw, (D, D), dtype=jnp.float32)
    bias = 0.01 * jax.random.normal(kb, (D,), dtype=jnp.float32)
    sublayer_out = x @ W + bias

    out = sublayer_connection(x, sublayer_out, a_2, b_2)
    out = jax.block_until_ready(out)

    ref = _reference(x, sublayer_out, a_2, b_2)
    assert out.shape == (B, S, D)
    # Exact divide in the kernel -> tight tolerance.
    assert jnp.allclose(out, ref, atol=1e-5, rtol=1e-5), "mismatch vs reference"

    print("KERNEL_OK")
</pallas_src>

<mosaic_0001>
module attributes {stable_mosaic.version = 11 : i64} {
  func.func @_sublayer_conn_kernel(%arg0: i32, %arg1: memref<16x128xf32, #tpu.memory_space<vmem>>, %arg2: memref<16x128xf32, #tpu.memory_space<vmem>>, %arg3: memref<1x128xf32, #tpu.memory_space<vmem>>, %arg4: memref<1x128xf32, #tpu.memory_space<vmem>>, %arg5: memref<16x128xf32, #tpu.memory_space<vmem>>) attributes {dimension_semantics = [#tpu.dimension_semantics<parallel>], iteration_bounds = array<i64: 1>, scalar_prefetch = 0 : i64, scratch_operands = 0 : i64, tpu.core_type = #tpu.core_type<tc>, window_params = [{transform_indices = @transform_0, window_bounds = array<i64: 16, 128>}, {transform_indices = @transform_1, window_bounds = array<i64: 16, 128>}, {pipeline_mode = #tpu.pipeline_mode<synchronous>, transform_indices = @transform_2, window_bounds = array<i64: 1, 128>}, {pipeline_mode = #tpu.pipeline_mode<synchronous>, transform_indices = @transform_3, window_bounds = array<i64: 1, 128>}, {transform_indices = @transform_4, window_bounds = array<i64: 16, 128>}]} {
    %c0 = arith.constant 0 : index
    %c0_0 = arith.constant 0 : index
    %0 = vector.load %arg1[%c0, %c0_0] : memref<16x128xf32, #tpu.memory_space<vmem>>, vector<16x128xf32>
    %c0_1 = arith.constant 0 : index
    %c0_2 = arith.constant 0 : index
    %1 = vector.load %arg2[%c0_1, %c0_2] : memref<16x128xf32, #tpu.memory_space<vmem>>, vector<16x128xf32>
    %2 = arith.addf %0, %1 : vector<16x128xf32>
    %cst = arith.constant dense<0.000000e+00> : vector<16xf32>
    %3 = vector.multi_reduction <add>, %2, %cst [1] : vector<16x128xf32> to vector<16xf32>
    %4 = vector.shape_cast %3 : vector<16xf32> to vector<16x1xf32>
    %cst_3 = arith.constant 1.280000e+02 : f32
    %5 = vector.broadcast %cst_3 : f32 to vector<16x1xf32>
    %6 = arith.divf %4, %5 : vector<16x1xf32>
    %7 = vector.broadcast %6 : vector<16x1xf32> to vector<16x128xf32>
    %8 = arith.subf %2, %7 : vector<16x128xf32>
    %9 = arith.mulf %8, %8 : vector<16x128xf32>
    %cst_4 = arith.constant dense<0.000000e+00> : vector<16xf32>
    %10 = vector.multi_reduction <add>, %9, %cst_4 [1] : vector<16x128xf32> to vector<16xf32>
    %11 = vector.shape_cast %10 : vector<16xf32> to vector<16x1xf32>
    %cst_5 = arith.constant 1.270000e+02 : f32
    %12 = vector.broadcast %cst_5 : f32 to vector<16x1xf32>
    %13 = arith.divf %11, %12 : vector<16x1xf32>
    %14 = math.sqrt %13 : vector<16x1xf32>
    %c0_6 = arith.constant 0 : index
    %c0_7 = arith.constant 0 : index
    %15 = vector.load %arg3[%c0_6, %c0_7] : memref<1x128xf32, #tpu.memory_space<vmem>>, vector<1x128xf32>
    %c0_8 = arith.constant 0 : index
    %c0_9 = arith.constant 0 : index
    %16 = vector.load %arg4[%c0_8, %c0_9] : memref<1x128xf32, #tpu.memory_space<vmem>>, vector<1x128xf32>
    %17 = vector.broadcast %15 : vector<1x128xf32> to vector<16x128xf32>
    %18 = arith.mulf %17, %8 : vector<16x128xf32>
    %cst_10 = arith.constant 9.99999997E-7 : f32
    %19 = vector.broadcast %cst_10 : f32 to vector<16x1xf32>
    %20 = arith.addf %14, %19 : vector<16x1xf32>
    %21 = vector.broadcast %20 : vector<16x1xf32> to vector<16x128xf32>
    %22 = arith.divf %18, %21 : vector<16x128xf32>
    %23 = vector.broadcast %16 : vector<1x128xf32> to vector<16x128xf32>
    %24 = arith.addf %22, %23 : vector<16x128xf32>
    %c0_11 = arith.constant 0 : index
    %c0_12 = arith.constant 0 : index
    %25 = vector.load %arg5[%c0_11, %c0_12] : memref<16x128xf32, #tpu.memory_space<vmem>>, vector<16x128xf32>
    tpu.vector_store %arg5[%c0_11, %c0_12], %24 {strides = array<i32>} : memref<16x128xf32, #tpu.memory_space<vmem>>, vector<16x128xf32>,
    return
  }
  func.func @transform_0(%arg0: i32) -> (i32, i32) {
    %c0_i32 = arith.constant 0 : i32
    %c0_i32_0 = arith.constant 0 : i32
    return %arg0, %c0_i32 : i32, i32
  }
  func.func @transform_1(%arg0: i32) -> (i32, i32) {
    %c0_i32 = arith.constant 0 : i32
    %c0_i32_0 = arith.constant 0 : i32
    return %arg0, %c0_i32 : i32, i32
  }
  func.func @transform_2(%arg0: i32) -> (i32, i32) {
    %c0_i32 = arith.constant 0 : i32
    %c0_i32_0 = arith.constant 0 : i32
    %c0_i32_1 = arith.constant 0 : i32
    return %c0_i32, %c0_i32_0 : i32, i32
  }
  func.func @transform_3(%arg0: i32) -> (i32, i32) {
    %c0_i32 = arith.constant 0 : i32
    %c0_i32_0 = arith.constant 0 : i32
    %c0_i32_1 = arith.constant 0 : i32
    return %c0_i32, %c0_i32_0 : i32, i32
  }
  func.func @transform_4(%arg0: i32) -> (i32, i32) {
    %c0_i32 = arith.constant 0 : i32
    %c0_i32_0 = arith.constant 0 : i32
    return %arg0, %c0_i32 : i32, i32
  }
}

</mosaic_0001>

<llo_original>
// kernel: tpu_custom_call.1
$region0: #{tpu_custom_call.1}
  #allocation0 [shape = 'u32[]', space=smem, size = 0x4, offset = 0x4, fixed_abs, tag = 'smem constant byte address 0x4 - core index']
  #allocation1 [shape = 'u32[72,128]{1,0:T(1,128)}', space=vmem, size = 0x9000, scoped, tag = 'internal scratch']
  %s0 = inlined_call_operand.hbm [shape: f32[16,128], index: 0, kind: input, shape index: {}]
  %s1 = inlined_call_operand.hbm [shape: f32[16,128], index: 1, kind: input, shape index: {}]
  %s2 = inlined_call_operand.vmem [shape: f32[1,128], index: 2, kind: input, shape index: {}]
  %s3 = inlined_call_operand.vmem [shape: f32[1,128], index: 3, kind: input, shape index: {}]
  %s4 = inlined_call_operand.hbm [shape: f32[16,128], index: 4, kind: output, shape index: {}]
  %s5 = sld [smem:[#allocation0]]
  $region34: #{tpu_custom_call.1} parent=0
    _
  %s7 = ssub.s32 1, %s5
  %s8 = scalar_select 0, %s7, %s5
  $region1: #{tpu_custom_call.1} parent=0
    #allocation2 [shape = 'u8[8192]{0}', space=vmem, size = 0x2000, scoped, tag = 'input window, operand 0, single buffered']
    #allocation3 [shape = 's32[1]{0}', space=sflag, size = 0x4, scoped, tag = 'scoped memory for tpu_custom_call.1']
    #allocation4 [shape = 's32[1]{0}', space=sflag, size = 0x4, scoped, tag = 'scoped memory for tpu_custom_call.1']
    #allocation5 [shape = 'u8[8192]{0}', space=vmem, size = 0x2000, scoped, tag = 'input window, operand 1, single buffered']
    #allocation6 [shape = 's32[1]{0}', space=sflag, size = 0x4, scoped, tag = 'scoped memory for tpu_custom_call.1']
    #allocation7 [shape = 'u8[8192]{0}', space=vmem, size = 0x2000, scoped, tag = 'output window, operand 0, single buffered']
    %9 = vsyncpa [#allocation3], 0
    %10 = vsyncpa [#allocation6], 0
    %11 = vsyncpa [#allocation4], 0
    // Predicated region
    $region2: #{tpu_custom_call.1} parent=1 // pred_check
      _
    $region3: #{tpu_custom_call.1} parent=1 // pred_check_branch
      %13 = sbr.rel (0) target = $region5
    $region4: #{tpu_custom_call.1} parent=1 // pred_region
      %15 = vsyncadd [#allocation3], 0
      %s16 = sshll.u32 %s0, 4
      %s17 = int_to_ptr.hbm [resolvable:$true] %s16
      %s18 = sshll.u32 [#allocation2], 4
      %s19 = int_to_ptr.vmem [resolvable:$true] %s18
      %24 = dma.hbm_to_vmem [thread:$0]  %s17, 256, %s19, [#allocation3], 128, 128, 8
    $region5: #{tpu_custom_call.1} parent=1 // pred_fallthru
      _
    // Predicated region
    $region6: #{tpu_custom_call.1} parent=1 // pred_check
      _
    $region7: #{tpu_custom_call.1} parent=1 // pred_check_branch
      %26 = sbr.rel (0) target = $region9
    $region8: #{tpu_custom_call.1} parent=1 // pred_region
      %28 = vsyncadd [#allocation6], 0
      %s29 = sshll.u32 %s1, 4
      %s30 = int_to_ptr.hbm [resolvable:$true] %s29
      %s31 = sshll.u32 [#allocation5], 4
      %s32 = int_to_ptr.vmem [resolvable:$true] %s31
      %37 = dma.hbm_to_vmem [thread:$0]  %s30, 256, %s32, [#allocation6], 128, 128, 8
    $region9: #{tpu_custom_call.1} parent=1 // pred_fallthru
      _
    // Predicated region
    $region10: #{tpu_custom_call.1} parent=1 // pred_check
      _
    $region11: #{tpu_custom_call.1} parent=1 // pred_check_branch
      %39 = sbr.rel (0) target = $region13
    $region12: #{tpu_custom_call.1} parent=1 // pred_region
      _
    $region13: #{tpu_custom_call.1} parent=1 // pred_fallthru
      _
    // Predicated region
    $region14: #{tpu_custom_call.1} parent=1 // pred_check
      _
    $region15: #{tpu_custom_call.1} parent=1 // pred_check_branch
      %41 = sbr.rel (0) target = $region17
    $region16: #{tpu_custom_call.1} parent=1 // pred_region
      _
    $region17: #{tpu_custom_call.1} parent=1 // pred_fallthru
      _
    // Predicated region
    $region18: #{tpu_custom_call.1} parent=1 // pred_check
      _
    $region19: #{tpu_custom_call.1} parent=1 // pred_check_branch
      %43 = sbr.rel (0) target = $region21
    $region20: #{tpu_custom_call.1} parent=1 // pred_region
      %45 = dma.done [#allocation3], 256
    $region21: #{tpu_custom_call.1} parent=1 // pred_fallthru
      _
    // Predicated region
    $region22: #{tpu_custom_call.1} parent=1 // pred_check
      _
    $region23: #{tpu_custom_call.1} parent=1 // pred_check_branch
      %47 = sbr.rel (0) target = $region25
    $region24: #{tpu_custom_call.1} parent=1 // pred_region
      %49 = dma.done [#allocation6], 256
    $region25: #{tpu_custom_call.1} parent=1 // pred_fallthru
      _
    %v50 = vld [vmem:[#allocation2] sm:$0xff]
    %v51 = vld [vmem:[#allocation2 + $0x8] sm:$0xff]
    %v52 = vld [vmem:[#allocation5] sm:$0xff]
    %v53 = vld [vmem:[#allocation5 + $0x8] sm:$0xff]
    %v54 = vadd.f32 %v50, %v52
    %v55 = vadd.f32 %v51, %v53
    %56 = vadd.xlane.f32.xlu0 %v54
    %v57 = vpop.xlane.xlu0 %56
    %58 = vadd.xlane.f32.xlu0 %v55
    %v59 = vpop.xlane.xlu0 %58
    %v60 = vrcp.pop 128.0
    %v61 = vmul.f32 128.0, %v60
    %v62 = vsub.f32 1.0, %v61
    %v63 = vmul.f32 %v60, %v62
    %v64 = vadd.f32 %v60, %v63
    %vm65 = vweird.f32 %v60
    %v66 = vsel %vm65, %v60, %v64
    %v67 = vmul.f32 %v57, %v66
    %v68 = vmul.f32 %v59, %v66
    %v69 = vsub.f32 %v54, %v67
    %v70 = vsub.f32 %v55, %v68
    %v71 = vmul.f32 %v69, %v69
    %v72 = vmul.f32 %v70, %v70
    %73 = vadd.xlane.f32.xlu0 %v71
    %v74 = vpop.xlane.xlu0 %73
    %75 = vadd.xlane.f32.xlu0 %v72
    %v76 = vpop.xlane.xlu0 %75
    %v77 = vrcp.pop 127.0
    %v78 = vmul.f32 127.0, %v77
    %v79 = vsub.f32 1.0, %v78
    %v80 = vmul.f32 %v77, %v79
    %v81 = vadd.f32 %v77, %v80
    %vm82 = vweird.f32 %v77
    %v83 = vsel %vm82, %v77, %v81
    %v84 = vmul.f32 %v74, %v83
    %v85 = vmul.f32 %v76, %v83
    %v86 = vrsqrt.pop %v84
    %v87 = vmul.f32 %v86, %v84
    %v88 = vmul.f32 %v87, %v86
    %v89 = vmul.f32 0.5, %v88
    %v90 = vsub.f32 1.5, %v89
    %v91 = vmul.f32 %v86, %v90
    %v92 = vmul.f32 %v84, %v91
    %vm93 = vcmp.eq.f32.partialorder %v84, inf
    %v94 = vsel %vm93, %v84, %v92
    %vm95 = vcmp.eq.f32.partialorder %v84, 0.0
    %v96 = vand.u32 %v84, 2147483648
    %v97 = vsel %vm95, %v96, %v94
    %v98 = vrsqrt.pop %v85
    %v99 = vmul.f32 %v98, %v85
    %v100 = vmul.f32 %v99, %v98
    %v101 = vmul.f32 0.5, %v100
    %v102 = vsub.f32 1.5, %v101
    %v103 = vmul.f32 %v98, %v102
    %v104 = vmul.f32 %v85, %v103
    %vm105 = vcmp.eq.f32.partialorder %v85, inf
    %v106 = vsel %vm105, %v85, %v104
    %vm107 = vcmp.eq.f32.partialorder %v85, 0.0
    %v108 = vand.u32 %v85, 2147483648
    %v109 = vsel %vm107, %v108, %v106
    %v110 = vld [vmem:[%s2] sm:$0x1]
    %v111 = vld [vmem:[%s3] sm:$0x1]
    %v113 = vperm.slane %v110, 0
    %v115 = vmul.f32 %v113, %v69
    %v116 = vmul.f32 %v113, %v70
    %v117 = vadd.f32 %v97, 1e-06
    %v118 = vadd.f32 %v109, 1e-06
    %v119 = vrcp.pop %v117
    %v120 = vmul.f32 %v117, %v119
    %v121 = vsub.f32 1.0, %v120
    %v122 = vmul.f32 %v119, %v121
    %v123 = vadd.f32 %v119, %v122
    %vm124 = vweird.f32 %v117
    %vm125 = vweird.f32 %v119
    %vm126 = vmor %vm124, %vm125
    %v127 = vsel %vm126, %v119, %v123
    %v128 = vand.u32 2147483647, %v117
    %vm129 = vcmp.eq.f32.partialorder %v128, 8.507059e+37
    %v130 = vand.u32 %v117, 2147483648
    %v131 = vor.u32 1.1754944e-38, %v130
    %v132 = vsel %vm129, %v131, %v127
    %v133 = vmul.f32 %v115, %v132
    %v134 = vrcp.pop %v118
    %v135 = vmul.f32 %v118, %v134
    %v136 = vsub.f32 1.0, %v135
    %v137 = vmul.f32 %v134, %v136
    %v138 = vadd.f32 %v134, %v137
    %vm139 = vweird.f32 %v118
    %vm140 = vweird.f32 %v134
    %vm141 = vmor %vm139, %vm140
    %v142 = vsel %vm141, %v134, %v138
    %v143 = vand.u32 2147483647, %v118
    %vm144 = vcmp.eq.f32.partialorder %v143, 8.507059e+37
    %v145 = vand.u32 %v118, 2147483648
    %v146 = vor.u32 1.1754944e-38, %v145
    %v147 = vsel %vm144, %v146, %v142
    %v148 = vmul.f32 %v116, %v147
    %v150 = vperm.slane %v111, 0
    %v152 = vadd.f32 %v133, %v150
    %v153 = vadd.f32 %v148, %v150
    %154 = vst [vmem:[#allocation7] sm:$0xff] %v152
    %155 = vst [vmem:[#allocation7 + $0x8] sm:$0xff] %v153
    // Predicated region
    $region26: #{tpu_custom_call.1} parent=1 // pred_check
      _
    $region27: #{tpu_custom_call.1} parent=1 // pred_check_branch
      %157 = sbr.rel (0) target = $region29
    $region28: #{tpu_custom_call.1} parent=1 // pred_region
      %159 = vsyncadd [#allocation4], 0
      %s160 = sshll.u32 [#allocation7], 4
      %s161 = int_to_ptr.vmem [resolvable:$true] %s160
      %s162 = sshll.u32 %s4, 4
      %s163 = int_to_ptr.hbm [resolvable:$true] %s162
      %168 = dma.vmem_to_hbm [thread:$0]  %s161, 256, %s163, [#allocation4], 128, 128, 8
    $region29: #{tpu_custom_call.1} parent=1 // pred_fallthru
      _
    // Predicated region
    $region30: #{tpu_custom_call.1} parent=1 // pred_check
      _
    $region31: #{tpu_custom_call.1} parent=1 // pred_check_branch
      %170 = sbr.rel (0) target = $region33
    $region32: #{tpu_custom_call.1} parent=1 // pred_region
      %172 = dma.done [#allocation4], 256
    $region33: #{tpu_custom_call.1} parent=1 // pred_fallthru
      _
    %173 = vsyncpa [#allocation3], 1
    %174 = vsyncpa [#allocation6], 1
    %175 = vsyncpa [#allocation4], 1

</llo_original>
